<compile_context>
chip_gen: v5e
topology: v5e:2x2
jax: 0.10.0
libtpu: 0.0.40
codegen_flags: <defaults>
</compile_context>

<pallas_src>
import math

import jax
import jax.numpy as jnp
from jax.experimental import pallas as pl
from jax.experimental.pallas import tpu as pltpu  # noqa: F401  (TPU backend import)

# ---------------- model dims (small, consistent with the module's forward) ----
B = 2            # batch
S = 8            # sequence length
H = 32           # embedding_size (synthetic, stands in for 768)
NUM_HEADS = 2
HEAD_DIM = H // NUM_HEADS
FFN = 64         # intermediate size
VOCAB = 128
CLS_HID = 256    # classifier hidden (nn.Linear(embedding_size, 256))
NUM_LABELS = 3
LOGIT_PAD = 128  # lane-dense logits; sliced to NUM_LABELS in the wrapper
BS = B * S

# rows of the packed (11, H) parameter block
(ROW_EMB_G, ROW_EMB_B, ROW_BQ, ROW_BK, ROW_BV, ROW_BO,
 ROW_LN1_G, ROW_LN1_B, ROW_BF2, ROW_LN2_G, ROW_LN2_B) = range(11)
N_PACK = 11


# ---------------------------- in-kernel helpers --------------------------------
def _layer_norm(x, gamma, beta, eps=1e-12):
    mean = jnp.mean(x, axis=-1, keepdims=True)
    var = jnp.mean((x - mean) ** 2, axis=-1, keepdims=True)
    return (x - mean) * jax.lax.rsqrt(var + eps) * gamma + beta


def _gelu(x):
    # TODO(synk): HF BERT uses exact (erf) GELU; tanh approximation keeps the
    # transcendental on the EUP and lowers cleanly on all generations.
    c = math.sqrt(2.0 / math.pi)
    return 0.5 * x * (1.0 + jnp.tanh(c * (x + 0.044715 * x * x * x)))


# -------------------------- fused encoder + classifier -------------------------
def bert_fused_kernel(x_ref, bias_ref, pack_ref, bf1_ref, cb1_ref, cb2_ref,
                      wq_ref, wk_ref, wv_ref, wo_ref, wf1_ref, wf2_ref,
                      cw1_ref, cw2_ref, out_ref):
    f32 = jnp.float32
    bf16 = jnp.bfloat16

    pack = pack_ref[...]                                   # (11, H) f32
    row = lambda r: pack[r:r + 1, :]                       # (1, H) broadcastable

    # ---- embedding layernorm --------------------------------------------------
    x = _layer_norm(x_ref[...], row(ROW_EMB_G), row(ROW_EMB_B))        # (BS, H) f32
    xb = x.astype(bf16)

    # ---- batched Q/K/V projections over all B*S rows (bf16 MXU, f32 acc) ------
    q = jnp.dot(xb, wq_ref[...], preferred_element_type=f32) + row(ROW_BQ)
    k = jnp.dot(xb, wk_ref[...], preferred_element_type=f32) + row(ROW_BK)
    v = jnp.dot(xb, wv_ref[...], preferred_element_type=f32) + row(ROW_BV)

    q3 = q.reshape(B, S, H)
    k3 = k.reshape(B, S, H)
    v3 = v.reshape(B, S, H)
    bias = bias_ref[...]                                   # (B, 1, S) f32, precomputed

    # ---- multi-head attention: batched over B, heads unrolled (no .T/concat) --
    scale = 1.0 / math.sqrt(HEAD_DIM)
    attn = jnp.zeros((BS, H), f32)
    for h in range(NUM_HEADS):
        lo = h * HEAD_DIM
        qh = q3[:, :, lo:lo + HEAD_DIM].astype(bf16)       # (B, S, HD)
        kh = k3[:, :, lo:lo + HEAD_DIM].astype(bf16)
        vh = v3[:, :, lo:lo + HEAD_DIM].astype(bf16)
        s = jnp.einsum('bqd,bkd->bqk', qh, kh, preferred_element_type=f32) * scale
        s = s + bias                                       # broadcast over query dim
        m = jnp.max(s, axis=-1, keepdims=True)
        p = jnp.exp(s - m)
        denom = jnp.sum(p, axis=-1, keepdims=True)
        p = p * pl.reciprocal(denom, approx=True)          # EUP slot, frees VALU
        ctx = jnp.einsum('bqk,bkd->bqd', p.astype(bf16), vh,
                         preferred_element_type=f32)       # (B, S, HD)
        wo_h = wo_ref[lo:lo + HEAD_DIM, :]                 # (HD, H) bf16 sublane slice
        attn = attn + jnp.dot(ctx.reshape(BS, HEAD_DIM).astype(bf16), wo_h,
                              preferred_element_type=f32)
    attn = attn + row(ROW_BO)

    h1 = _layer_norm(x + attn, row(ROW_LN1_G), row(ROW_LN1_B))         # (BS, H)

    # ---- feed-forward ---------------------------------------------------------
    ff = jnp.dot(h1.astype(bf16), wf1_ref[...], preferred_element_type=f32) + bf1_ref[...]
    ff = _gelu(ff)
    ff = jnp.dot(ff.astype(bf16), wf2_ref[...], preferred_element_type=f32) + row(ROW_BF2)
    hidden = _layer_norm(h1 + ff, row(ROW_LN2_G), row(ROW_LN2_B))      # (BS, H)

    # ---- CLS token + classifier head (fused; lane-dense padded logits) --------
    cls = hidden.reshape(B, S, H)[:, 0:1, :].reshape(B, H)             # (B, H)
    c1 = jnp.dot(cls.astype(bf16), cw1_ref[...], preferred_element_type=f32) + cb1_ref[...]
    logits = jnp.dot(c1.astype(bf16), cw2_ref[...], preferred_element_type=f32) + cb2_ref[...]
    out_ref[...] = logits.astype(out_ref.dtype)                        # (B, LOGIT_PAD)


# ---------------------------------- wrapper -------------------------------------
def _forward(input_ids, attention_mask, params):
    # glue: embedding gather + positional embeddings (data-dependent gather stays in JAX)
    x = params["word_emb"][input_ids] + params["pos_emb"][None, :, :]      # (B, S, H) f32
    x2d = x.reshape(BS, H).astype(jnp.float32)
    # additive attention bias, precomputed once in the wrapper
    bias = ((1.0 - attention_mask.astype(jnp.float32)) * -1e9).reshape(B, 1, S)

    # single fused pallas_call: no grid, every operand resident in VMEM
    logits_padded = pl.pallas_call(
        bert_fused_kernel,
        out_shape=jax.ShapeDtypeStruct((B, LOGIT_PAD), jnp.float32),
    )(x2d, bias,
      params["pack_h"], params["bf1"], params["cls_b1"], params["cls_b2p"],
      params["wq"], params["wk"], params["wv"], params["wo"],
      params["wf1"], params["wf2"], params["cls_w1"], params["cls_w2p"])

    return logits_padded[:, :NUM_LABELS]                                   # (B, num_labels)


custom_bert_forward = jax.jit(_forward)


# --------------------------- deterministic parameters ----------------------------
def init_params(seed=0):
    key = jax.random.PRNGKey(seed)
    ks = jax.random.split(key, 16)
    n32 = lambda k, shape: (0.02 * jax.random.normal(k, shape)).astype(jnp.float32)
    nbf = lambda k, shape: (0.02 * jax.random.normal(k, shape)).astype(jnp.bfloat16)
    zeros = lambda shape: jnp.zeros(shape, jnp.float32)
    ones = lambda shape: jnp.ones(shape, jnp.float32)

    # packed LayerNorm / bias block: rows follow ROW_* order above
    pack_rows = [
        ones((H,)), zeros((H,)),            # emb LN gamma / beta
        zeros((H,)), zeros((H,)),           # bq, bk
        zeros((H,)), zeros((H,)),           # bv, bo
        ones((H,)), zeros((H,)),            # LN1 gamma / beta
        zeros((H,)),                        # bf2
        ones((H,)), zeros((H,)),            # LN2 gamma / beta
    ]
    pack_h = jnp.stack(pack_rows, axis=0)                                  # (11, H) f32

    cls_w2 = n32(ks[9], (CLS_HID, NUM_LABELS))
    cls_w2p = jnp.zeros((CLS_HID, LOGIT_PAD), jnp.float32).at[:, :NUM_LABELS].set(cls_w2)

    return {
        "word_emb": n32(ks[0], (VOCAB, H)),
        "pos_emb": n32(ks[1], (S, H)),
        "pack_h": pack_h,
        # bf16 matmul weights (f32 accumulation happens inside the kernel)
        "wq": nbf(ks[2], (H, H)),
        "wk": nbf(ks[3], (H, H)),
        "wv": nbf(ks[4], (H, H)),
        "wo": nbf(ks[5], (H, H)),
        "wf1": nbf(ks[6], (H, FFN)),
        "wf2": nbf(ks[7], (FFN, H)),
        "bf1": zeros((1, FFN)),
        "cls_w1": nbf(ks[8], (H, CLS_HID)),
        "cls_b1": zeros((1, CLS_HID)),
        "cls_w2p": cls_w2p.astype(jnp.bfloat16),
        "cls_b2p": zeros((1, LOGIT_PAD)),
    }
    # TODO(synk): the HF pretrained encoder weights cannot be loaded here; the
    # encoder is a single synthetic BERT-style layer with deterministic init.


if __name__ == "__main__":
    params = init_params(0)
    key = jax.random.PRNGKey(0)
    k_ids, _ = jax.random.split(key)
    input_ids = jax.random.randint(k_ids, (B, S), 0, VOCAB, dtype=jnp.int32)
    attention_mask = jnp.ones((B, S), jnp.int32).at[1, S - 2:].set(0)  # pad last 2 tokens of sample 1

    logits = custom_bert_forward(input_ids, attention_mask, params)
    jax.block_until_ready(logits)
    assert logits.shape == (B, NUM_LABELS) and logits.dtype == jnp.float32
    assert bool(jnp.all(jnp.isfinite(logits)))
    print("KERNEL_OK")
</pallas_src>

<mosaic_0001>
module attributes {stable_mosaic.version = 11 : i64} {
  func.func @bert_fused_kernel(%arg0: memref<16x32xf32, #tpu.memory_space<vmem>>, %arg1: memref<2x1x8xf32, #tpu.memory_space<vmem>>, %arg2: memref<11x32xf32, #tpu.memory_space<vmem>>, %arg3: memref<1x64xf32, #tpu.memory_space<vmem>>, %arg4: memref<1x256xf32, #tpu.memory_space<vmem>>, %arg5: memref<1x128xf32, #tpu.memory_space<vmem>>, %arg6: memref<32x32xbf16, #tpu.memory_space<vmem>>, %arg7: memref<32x32xbf16, #tpu.memory_space<vmem>>, %arg8: memref<32x32xbf16, #tpu.memory_space<vmem>>, %arg9: memref<32x32xbf16, #tpu.memory_space<vmem>>, %arg10: memref<32x64xbf16, #tpu.memory_space<vmem>>, %arg11: memref<64x32xbf16, #tpu.memory_space<vmem>>, %arg12: memref<32x256xbf16, #tpu.memory_space<vmem>>, %arg13: memref<256x128xbf16, #tpu.memory_space<vmem>>, %arg14: memref<2x128xf32, #tpu.memory_space<vmem>>) attributes {dimension_semantics = [], scalar_prefetch = 0 : i64, scratch_operands = 0 : i64, tpu.core_type = #tpu.core_type<tc>} {
    %c0 = arith.constant 0 : index
    %c0_0 = arith.constant 0 : index
    %0 = vector.load %arg2[%c0, %c0_0] : memref<11x32xf32, #tpu.memory_space<vmem>>, vector<11x32xf32>
    %c0_1 = arith.constant 0 : index
    %c0_2 = arith.constant 0 : index
    %1 = vector.load %arg0[%c0_1, %c0_2] : memref<16x32xf32, #tpu.memory_space<vmem>>, vector<16x32xf32>
    %2 = vector.extract_strided_slice %0 {offsets = [0, 0], sizes = [1, 32], strides = [1, 1]} : vector<11x32xf32> to vector<1x32xf32>
    %3 = vector.extract_strided_slice %0 {offsets = [1, 0], sizes = [1, 32], strides = [1, 1]} : vector<11x32xf32> to vector<1x32xf32>
    %cst = arith.constant dense<0.000000e+00> : vector<16xf32>
    %4 = vector.multi_reduction <add>, %1, %cst [1] : vector<16x32xf32> to vector<16xf32>
    %5 = vector.shape_cast %4 : vector<16xf32> to vector<16x1xf32>
    %cst_3 = arith.constant 3.200000e+01 : f32
    %6 = vector.broadcast %cst_3 : f32 to vector<16x1xf32>
    %7 = arith.divf %5, %6 : vector<16x1xf32>
    %8 = vector.broadcast %7 : vector<16x1xf32> to vector<16x32xf32>
    %9 = arith.subf %1, %8 : vector<16x32xf32>
    %10 = arith.mulf %9, %9 : vector<16x32xf32>
    %cst_4 = arith.constant dense<0.000000e+00> : vector<16xf32>
    %11 = vector.multi_reduction <add>, %10, %cst_4 [1] : vector<16x32xf32> to vector<16xf32>
    %12 = vector.shape_cast %11 : vector<16xf32> to vector<16x1xf32>
    %cst_5 = arith.constant 3.200000e+01 : f32
    %13 = vector.broadcast %cst_5 : f32 to vector<16x1xf32>
    %14 = arith.divf %12, %13 : vector<16x1xf32>
    %15 = vector.broadcast %7 : vector<16x1xf32> to vector<16x32xf32>
    %16 = arith.subf %1, %15 : vector<16x32xf32>
    %cst_6 = arith.constant 9.99999996E-13 : f32
    %17 = vector.broadcast %cst_6 : f32 to vector<16x1xf32>
    %18 = arith.addf %14, %17 : vector<16x1xf32>
    %19 = math.rsqrt %18 : vector<16x1xf32>
    %20 = vector.broadcast %19 : vector<16x1xf32> to vector<16x32xf32>
    %21 = arith.mulf %16, %20 : vector<16x32xf32>
    %22 = vector.broadcast %2 : vector<1x32xf32> to vector<16x32xf32>
    %23 = arith.mulf %21, %22 : vector<16x32xf32>
    %24 = vector.broadcast %3 : vector<1x32xf32> to vector<16x32xf32>
    %25 = arith.addf %23, %24 : vector<16x32xf32>
    %26 = arith.truncf %25 : vector<16x32xf32> to vector<16x32xbf16>
    %c0_7 = arith.constant 0 : index
    %c0_8 = arith.constant 0 : index
    %27 = vector.load %arg6[%c0_7, %c0_8] : memref<32x32xbf16, #tpu.memory_space<vmem>>, vector<32x32xbf16>
    %cst_9 = arith.constant dense<0.000000e+00> : vector<16x32xf32>
    %28 = tpu.matmul %26, %27, %cst_9 {dimension_numbers = #tpu.dot_dimension_numbers<[1], [0], [0], [1], [0, 0, 1, 1], [], []>} : vector<16x32xbf16>, vector<32x32xbf16>, vector<16x32xf32> -> vector<16x32xf32>
    %29 = vector.extract_strided_slice %0 {offsets = [2, 0], sizes = [1, 32], strides = [1, 1]} : vector<11x32xf32> to vector<1x32xf32>
    %30 = vector.broadcast %29 : vector<1x32xf32> to vector<16x32xf32>
    %31 = arith.addf %28, %30 : vector<16x32xf32>
    %c0_10 = arith.constant 0 : index
    %c0_11 = arith.constant 0 : index
    %32 = vector.load %arg7[%c0_10, %c0_11] : memref<32x32xbf16, #tpu.memory_space<vmem>>, vector<32x32xbf16>
    %cst_12 = arith.constant dense<0.000000e+00> : vector<16x32xf32>
    %33 = tpu.matmul %26, %32, %cst_12 {dimension_numbers = #tpu.dot_dimension_numbers<[1], [0], [0], [1], [0, 0, 1, 1], [], []>} : vector<16x32xbf16>, vector<32x32xbf16>, vector<16x32xf32> -> vector<16x32xf32>
    %34 = vector.extract_strided_slice %0 {offsets = [3, 0], sizes = [1, 32], strides = [1, 1]} : vector<11x32xf32> to vector<1x32xf32>
    %35 = vector.broadcast %34 : vector<1x32xf32> to vector<16x32xf32>
    %36 = arith.addf %33, %35 : vector<16x32xf32>
    %c0_13 = arith.constant 0 : index
    %c0_14 = arith.constant 0 : index
    %37 = vector.load %arg8[%c0_13, %c0_14] : memref<32x32xbf16, #tpu.memory_space<vmem>>, vector<32x32xbf16>
    %cst_15 = arith.constant dense<0.000000e+00> : vector<16x32xf32>
    %38 = tpu.matmul %26, %37, %cst_15 {dimension_numbers = #tpu.dot_dimension_numbers<[1], [0], [0], [1], [0, 0, 1, 1], [], []>} : vector<16x32xbf16>, vector<32x32xbf16>, vector<16x32xf32> -> vector<16x32xf32>
    %39 = vector.extract_strided_slice %0 {offsets = [4, 0], sizes = [1, 32], strides = [1, 1]} : vector<11x32xf32> to vector<1x32xf32>
    %40 = vector.broadcast %39 : vector<1x32xf32> to vector<16x32xf32>
    %41 = arith.addf %38, %40 : vector<16x32xf32>
    %42 = vector.shape_cast %31 : vector<16x32xf32> to vector<2x8x32xf32>
    %43 = vector.shape_cast %36 : vector<16x32xf32> to vector<2x8x32xf32>
    %44 = vector.shape_cast %41 : vector<16x32xf32> to vector<2x8x32xf32>
    %c0_16 = arith.constant 0 : index
    %c0_17 = arith.constant 0 : index
    %c0_18 = arith.constant 0 : index
    %45 = vector.load %arg1[%c0_16, %c0_17, %c0_18] : memref<2x1x8xf32, #tpu.memory_space<vmem>>, vector<2x1x8xf32>
    %cst_19 = arith.constant 0.000000e+00 : f32
    %46 = vector.broadcast %cst_19 : f32 to vector<16x32xf32>
    %47 = vector.extract_strided_slice %42 {offsets = [0, 0, 0], sizes = [2, 8, 16], strides = [1, 1, 1]} : vector<2x8x32xf32> to vector<2x8x16xf32>
    %48 = arith.truncf %47 : vector<2x8x16xf32> to vector<2x8x16xbf16>
    %49 = vector.extract_strided_slice %43 {offsets = [0, 0, 0], sizes = [2, 8, 16], strides = [1, 1, 1]} : vector<2x8x32xf32> to vector<2x8x16xf32>
    %50 = arith.truncf %49 : vector<2x8x16xf32> to vector<2x8x16xbf16>
    %51 = vector.extract_strided_slice %44 {offsets = [0, 0, 0], sizes = [2, 8, 16], strides = [1, 1, 1]} : vector<2x8x32xf32> to vector<2x8x16xf32>
    %52 = arith.truncf %51 : vector<2x8x16xf32> to vector<2x8x16xbf16>
    "tpu.trace_start"() <{level = 10 : i32, message = "bqd,bkd->bqk"}> : () -> ()
    %cst_20 = arith.constant dense<0.000000e+00> : vector<2x8x8xf32>
    %53 = tpu.matmul %48, %50, %cst_20 {dimension_numbers = #tpu.dot_dimension_numbers<[2], [2], [1], [1], [0, 0, 0, 1, 1, 1], [0], [0]>} : vector<2x8x16xbf16>, vector<2x8x16xbf16>, vector<2x8x8xf32> -> vector<2x8x8xf32>
    "tpu.trace_stop"() : () -> ()
    %cst_21 = arith.constant 2.500000e-01 : f32
    %54 = vector.broadcast %cst_21 : f32 to vector<2x8x8xf32>
    %55 = arith.mulf %53, %54 : vector<2x8x8xf32>
    %56 = vector.broadcast %45 : vector<2x1x8xf32> to vector<2x8x8xf32>
    %57 = arith.addf %55, %56 : vector<2x8x8xf32>
    %cst_22 = arith.constant dense<0xFF800000> : vector<2x8xf32>
    %58 = vector.multi_reduction <maximumf>, %57, %cst_22 [2] : vector<2x8x8xf32> to vector<2x8xf32>
    %59 = vector.shape_cast %58 : vector<2x8xf32> to vector<2x8x1xf32>
    %60 = vector.broadcast %59 : vector<2x8x1xf32> to vector<2x8x8xf32>
    %61 = arith.subf %57, %60 : vector<2x8x8xf32>
    %62 = math.exp %61 : vector<2x8x8xf32>
    %cst_23 = arith.constant dense<0.000000e+00> : vector<2x8xf32>
    %63 = vector.multi_reduction <add>, %62, %cst_23 [2] : vector<2x8x8xf32> to vector<2x8xf32>
    %64 = vector.shape_cast %63 : vector<2x8xf32> to vector<2x8x1xf32>
    %65 = tpu.reciprocal %64 {approx = true} : vector<2x8x1xf32> -> vector<2x8x1xf32>
    %66 = vector.broadcast %65 : vector<2x8x1xf32> to vector<2x8x8xf32>
    %67 = arith.mulf %62, %66 : vector<2x8x8xf32>
    %68 = arith.truncf %67 : vector<2x8x8xf32> to vector<2x8x8xbf16>
    "tpu.trace_start"() <{level = 10 : i32, message = "bqk,bkd->bqd"}> : () -> ()
    %cst_24 = arith.constant dense<0.000000e+00> : vector<2x8x16xf32>
    %69 = tpu.matmul %68, %52, %cst_24 {dimension_numbers = #tpu.dot_dimension_numbers<[2], [1], [1], [2], [0, 0, 0, 1, 1, 2], [0], [0]>} : vector<2x8x8xbf16>, vector<2x8x16xbf16>, vector<2x8x16xf32> -> vector<2x8x16xf32>
    "tpu.trace_stop"() : () -> ()
    %c0_25 = arith.constant 0 : index
    %c0_26 = arith.constant 0 : index
    %70 = vector.load %arg9[%c0_25, %c0_26] : memref<32x32xbf16, #tpu.memory_space<vmem>>, vector<16x32xbf16>
    %71 = vector.shape_cast %69 : vector<2x8x16xf32> to vector<16x16xf32>
    %72 = arith.truncf %71 : vector<16x16xf32> to vector<16x16xbf16>
    %cst_27 = arith.constant dense<0.000000e+00> : vector<16x32xf32>
    %73 = tpu.matmul %72, %70, %cst_27 {dimension_numbers = #tpu.dot_dimension_numbers<[1], [0], [0], [1], [0, 0, 1, 1], [], []>} : vector<16x16xbf16>, vector<16x32xbf16>, vector<16x32xf32> -> vector<16x32xf32>
    %74 = arith.addf %46, %73 : vector<16x32xf32>
    %75 = vector.extract_strided_slice %42 {offsets = [0, 0, 16], sizes = [2, 8, 16], strides = [1, 1, 1]} : vector<2x8x32xf32> to vector<2x8x16xf32>
    %76 = arith.truncf %75 : vector<2x8x16xf32> to vector<2x8x16xbf16>
    %77 = vector.extract_strided_slice %43 {offsets = [0, 0, 16], sizes = [2, 8, 16], strides = [1, 1, 1]} : vector<2x8x32xf32> to vector<2x8x16xf32>
    %78 = arith.truncf %77 : vector<2x8x16xf32> to vector<2x8x16xbf16>
    %79 = vector.extract_strided_slice %44 {offsets = [0, 0, 16], sizes = [2, 8, 16], strides = [1, 1, 1]} : vector<2x8x32xf32> to vector<2x8x16xf32>
    %80 = arith.truncf %79 : vector<2x8x16xf32> to vector<2x8x16xbf16>
    "tpu.trace_start"() <{level = 10 : i32, message = "bqd,bkd->bqk"}> : () -> ()
    %cst_28 = arith.constant dense<0.000000e+00> : vector<2x8x8xf32>
    %81 = tpu.matmul %76, %78, %cst_28 {dimension_numbers = #tpu.dot_dimension_numbers<[2], [2], [1], [1], [0, 0, 0, 1, 1, 1], [0], [0]>} : vector<2x8x16xbf16>, vector<2x8x16xbf16>, vector<2x8x8xf32> -> vector<2x8x8xf32>
    "tpu.trace_stop"() : () -> ()
    %cst_29 = arith.constant 2.500000e-01 : f32
    %82 = vector.broadcast %cst_29 : f32 to vector<2x8x8xf32>
    %83 = arith.mulf %81, %82 : vector<2x8x8xf32>
    %84 = vector.broadcast %45 : vector<2x1x8xf32> to vector<2x8x8xf32>
    %85 = arith.addf %83, %84 : vector<2x8x8xf32>
    %cst_30 = arith.constant dense<0xFF800000> : vector<2x8xf32>
    %86 = vector.multi_reduction <maximumf>, %85, %cst_30 [2] : vector<2x8x8xf32> to vector<2x8xf32>
    %87 = vector.shape_cast %86 : vector<2x8xf32> to vector<2x8x1xf32>
    %88 = vector.broadcast %87 : vector<2x8x1xf32> to vector<2x8x8xf32>
    %89 = arith.subf %85, %88 : vector<2x8x8xf32>
    %90 = math.exp %89 : vector<2x8x8xf32>
    %cst_31 = arith.constant dense<0.000000e+00> : vector<2x8xf32>
    %91 = vector.multi_reduction <add>, %90, %cst_31 [2] : vector<2x8x8xf32> to vector<2x8xf32>
    %92 = vector.shape_cast %91 : vector<2x8xf32> to vector<2x8x1xf32>
    %93 = tpu.reciprocal %92 {approx = true} : vector<2x8x1xf32> -> vector<2x8x1xf32>
    %94 = vector.broadcast %93 : vector<2x8x1xf32> to vector<2x8x8xf32>
    %95 = arith.mulf %90, %94 : vector<2x8x8xf32>
    %96 = arith.truncf %95 : vector<2x8x8xf32> to vector<2x8x8xbf16>
    "tpu.trace_start"() <{level = 10 : i32, message = "bqk,bkd->bqd"}> : () -> ()
    %cst_32 = arith.constant dense<0.000000e+00> : vector<2x8x16xf32>
    %97 = tpu.matmul %96, %80, %cst_32 {dimension_numbers = #tpu.dot_dimension_numbers<[2], [1], [1], [2], [0, 0, 0, 1, 1, 2], [0], [0]>} : vector<2x8x8xbf16>, vector<2x8x16xbf16>, vector<2x8x16xf32> -> vector<2x8x16xf32>
    "tpu.trace_stop"() : () -> ()
    %c16 = arith.constant 16 : index
    %c0_33 = arith.constant 0 : index
    %98 = vector.load %arg9[%c16, %c0_33] : memref<32x32xbf16, #tpu.memory_space<vmem>>, vector<16x32xbf16>
    %99 = vector.shape_cast %97 : vector<2x8x16xf32> to vector<16x16xf32>
    %100 = arith.truncf %99 : vector<16x16xf32> to vector<16x16xbf16>
    %cst_34 = arith.constant dense<0.000000e+00> : vector<16x32xf32>
    %101 = tpu.matmul %100, %98, %cst_34 {dimension_numbers = #tpu.dot_dimension_numbers<[1], [0], [0], [1], [0, 0, 1, 1], [], []>} : vector<16x16xbf16>, vector<16x32xbf16>, vector<16x32xf32> -> vector<16x32xf32>
    %102 = arith.addf %74, %101 : vector<16x32xf32>
    %103 = vector.extract_strided_slice %0 {offsets = [5, 0], sizes = [1, 32], strides = [1, 1]} : vector<11x32xf32> to vector<1x32xf32>
    %104 = vector.broadcast %103 : vector<1x32xf32> to vector<16x32xf32>
    %105 = arith.addf %102, %104 : vector<16x32xf32>
    %106 = arith.addf %25, %105 : vector<16x32xf32>
    %107 = vector.extract_strided_slice %0 {offsets = [6, 0], sizes = [1, 32], strides = [1, 1]} : vector<11x32xf32> to vector<1x32xf32>
    %108 = vector.extract_strided_slice %0 {offsets = [7, 0], sizes = [1, 32], strides = [1, 1]} : vector<11x32xf32> to vector<1x32xf32>
    %cst_35 = arith.constant dense<0.000000e+00> : vector<16xf32>
    %109 = vector.multi_reduction <add>, %106, %cst_35 [1] : vector<16x32xf32> to vector<16xf32>
    %110 = vector.shape_cast %109 : vector<16xf32> to vector<16x1xf32>
    %cst_36 = arith.constant 3.200000e+01 : f32
    %111 = vector.broadcast %cst_36 : f32 to vector<16x1xf32>
    %112 = arith.divf %110, %111 : vector<16x1xf32>
    %113 = vector.broadcast %112 : vector<16x1xf32> to vector<16x32xf32>
    %114 = arith.subf %106, %113 : vector<16x32xf32>
    %115 = arith.mulf %114, %114 : vector<16x32xf32>
    %cst_37 = arith.constant dense<0.000000e+00> : vector<16xf32>
    %116 = vector.multi_reduction <add>, %115, %cst_37 [1] : vector<16x32xf32> to vector<16xf32>
    %117 = vector.shape_cast %116 : vector<16xf32> to vector<16x1xf32>
    %cst_38 = arith.constant 3.200000e+01 : f32
    %118 = vector.broadcast %cst_38 : f32 to vector<16x1xf32>
    %119 = arith.divf %117, %118 : vector<16x1xf32>
    %120 = vector.broadcast %112 : vector<16x1xf32> to vector<16x32xf32>
    %121 = arith.subf %106, %120 : vector<16x32xf32>
    %cst_39 = arith.constant 9.99999996E-13 : f32
    %122 = vector.broadcast %cst_39 : f32 to vector<16x1xf32>
    %123 = arith.addf %119, %122 : vector<16x1xf32>
    %124 = math.rsqrt %123 : vector<16x1xf32>
    %125 = vector.broadcast %124 : vector<16x1xf32> to vector<16x32xf32>
    %126 = arith.mulf %121, %125 : vector<16x32xf32>
    %127 = vector.broadcast %107 : vector<1x32xf32> to vector<16x32xf32>
    %128 = arith.mulf %126, %127 : vector<16x32xf32>
    %129 = vector.broadcast %108 : vector<1x32xf32> to vector<16x32xf32>
    %130 = arith.addf %128, %129 : vector<16x32xf32>
    %131 = arith.truncf %130 : vector<16x32xf32> to vector<16x32xbf16>
    %c0_40 = arith.constant 0 : index
    %c0_41 = arith.constant 0 : index
    %132 = vector.load %arg10[%c0_40, %c0_41] : memref<32x64xbf16, #tpu.memory_space<vmem>>, vector<32x64xbf16>
    %cst_42 = arith.constant dense<0.000000e+00> : vector<16x64xf32>
    %133 = tpu.matmul %131, %132, %cst_42 {dimension_numbers = #tpu.dot_dimension_numbers<[1], [0], [0], [1], [0, 0, 1, 1], [], []>} : vector<16x32xbf16>, vector<32x64xbf16>, vector<16x64xf32> -> vector<16x64xf32>
    %c0_43 = arith.constant 0 : index
    %c0_44 = arith.constant 0 : index
    %134 = vector.load %arg3[%c0_43, %c0_44] : memref<1x64xf32, #tpu.memory_space<vmem>>, vector<1x64xf32>
    %135 = vector.broadcast %134 : vector<1x64xf32> to vector<16x64xf32>
    %136 = arith.addf %133, %135 : vector<16x64xf32>
    %cst_45 = arith.constant 5.000000e-01 : f32
    %137 = vector.broadcast %cst_45 : f32 to vector<16x64xf32>
    %138 = arith.mulf %137, %136 : vector<16x64xf32>
    %cst_46 = arith.constant 4.471500e-02 : f32
    %139 = vector.broadcast %cst_46 : f32 to vector<16x64xf32>
    %140 = arith.mulf %139, %136 : vector<16x64xf32>
    %141 = arith.mulf %140, %136 : vector<16x64xf32>
    %142 = arith.mulf %141, %136 : vector<16x64xf32>
    %143 = arith.addf %136, %142 : vector<16x64xf32>
    %cst_47 = arith.constant 0.797884583 : f32
    %144 = vector.broadcast %cst_47 : f32 to vector<16x64xf32>
    %145 = arith.mulf %144, %143 : vector<16x64xf32>
    %146 = math.tanh %145 : vector<16x64xf32>
    %cst_48 = arith.constant 1.000000e+00 : f32
    %147 = vector.broadcast %cst_48 : f32 to vector<16x64xf32>
    %148 = arith.addf %147, %146 : vector<16x64xf32>
    %149 = arith.mulf %138, %148 : vector<16x64xf32>
    %150 = arith.truncf %149 : vector<16x64xf32> to vector<16x64xbf16>
    %c0_49 = arith.constant 0 : index
    %c0_50 = arith.constant 0 : index
    %151 = vector.load %arg11[%c0_49, %c0_50] : memref<64x32xbf16, #tpu.memory_space<vmem>>, vector<64x32xbf16>
    %cst_51 = arith.constant dense<0.000000e+00> : vector<16x32xf32>
    %152 = tpu.matmul %150, %151, %cst_51 {dimension_numbers = #tpu.dot_dimension_numbers<[1], [0], [0], [1], [0, 0, 1, 1], [], []>} : vector<16x64xbf16>, vector<64x32xbf16>, vector<16x32xf32> -> vector<16x32xf32>
    %153 = vector.extract_strided_slice %0 {offsets = [8, 0], sizes = [1, 32], strides = [1, 1]} : vector<11x32xf32> to vector<1x32xf32>
    %154 = vector.broadcast %153 : vector<1x32xf32> to vector<16x32xf32>
    %155 = arith.addf %152, %154 : vector<16x32xf32>
    %156 = arith.addf %130, %155 : vector<16x32xf32>
    %157 = vector.extract_strided_slice %0 {offsets = [9, 0], sizes = [1, 32], strides = [1, 1]} : vector<11x32xf32> to vector<1x32xf32>
    %158 = vector.extract_strided_slice %0 {offsets = [10, 0], sizes = [1, 32], strides = [1, 1]} : vector<11x32xf32> to vector<1x32xf32>
    %cst_52 = arith.constant dense<0.000000e+00> : vector<16xf32>
    %159 = vector.multi_reduction <add>, %156, %cst_52 [1] : vector<16x32xf32> to vector<16xf32>
    %160 = vector.shape_cast %159 : vector<16xf32> to vector<16x1xf32>
    %cst_53 = arith.constant 3.200000e+01 : f32
    %161 = vector.broadcast %cst_53 : f32 to vector<16x1xf32>
    %162 = arith.divf %160, %161 : vector<16x1xf32>
    %163 = vector.broadcast %162 : vector<16x1xf32> to vector<16x32xf32>
    %164 = arith.subf %156, %163 : vector<16x32xf32>
    %165 = arith.mulf %164, %164 : vector<16x32xf32>
    %cst_54 = arith.constant dense<0.000000e+00> : vector<16xf32>
    %166 = vector.multi_reduction <add>, %165, %cst_54 [1] : vector<16x32xf32> to vector<16xf32>
    %167 = vector.shape_cast %166 : vector<16xf32> to vector<16x1xf32>
    %cst_55 = arith.constant 3.200000e+01 : f32
    %168 = vector.broadcast %cst_55 : f32 to vector<16x1xf32>
    %169 = arith.divf %167, %168 : vector<16x1xf32>
    %170 = vector.broadcast %162 : vector<16x1xf32> to vector<16x32xf32>
    %171 = arith.subf %156, %170 : vector<16x32xf32>
    %cst_56 = arith.constant 9.99999996E-13 : f32
    %172 = vector.broadcast %cst_56 : f32 to vector<16x1xf32>
    %173 = arith.addf %169, %172 : vector<16x1xf32>
    %174 = math.rsqrt %173 : vector<16x1xf32>
    %175 = vector.broadcast %174 : vector<16x1xf32> to vector<16x32xf32>
    %176 = arith.mulf %171, %175 : vector<16x32xf32>
    %177 = vector.broadcast %157 : vector<1x32xf32> to vector<16x32xf32>
    %178 = arith.mulf %176, %177 : vector<16x32xf32>
    %179 = vector.broadcast %158 : vector<1x32xf32> to vector<16x32xf32>
    %180 = arith.addf %178, %179 : vector<16x32xf32>
    %181 = vector.shape_cast %180 : vector<16x32xf32> to vector<2x8x32xf32>
    %182 = vector.extract_strided_slice %181 {offsets = [0, 0, 0], sizes = [2, 1, 32], strides = [1, 1, 1]} : vector<2x8x32xf32> to vector<2x1x32xf32>
    %183 = vector.shape_cast %182 : vector<2x1x32xf32> to vector<2x32xf32>
    %184 = arith.truncf %183 : vector<2x32xf32> to vector<2x32xbf16>
    %c0_57 = arith.constant 0 : index
    %c0_58 = arith.constant 0 : index
    %185 = vector.load %arg12[%c0_57, %c0_58] : memref<32x256xbf16, #tpu.memory_space<vmem>>, vector<32x256xbf16>
    %cst_59 = arith.constant dense<0.000000e+00> : vector<2x256xf32>
    %186 = tpu.matmul %184, %185, %cst_59 {dimension_numbers = #tpu.dot_dimension_numbers<[1], [0], [0], [1], [0, 0, 1, 1], [], []>} : vector<2x32xbf16>, vector<32x256xbf16>, vector<2x256xf32> -> vector<2x256xf32>
    %c0_60 = arith.constant 0 : index
    %c0_61 = arith.constant 0 : index
    %187 = vector.load %arg4[%c0_60, %c0_61] : memref<1x256xf32, #tpu.memory_space<vmem>>, vector<1x256xf32>
    %188 = vector.broadcast %187 : vector<1x256xf32> to vector<2x256xf32>
    %189 = arith.addf %186, %188 : vector<2x256xf32>
    %190 = arith.truncf %189 : vector<2x256xf32> to vector<2x256xbf16>
    %c0_62 = arith.constant 0 : index
    %c0_63 = arith.constant 0 : index
    %191 = vector.load %arg13[%c0_62, %c0_63] : memref<256x128xbf16, #tpu.memory_space<vmem>>, vector<256x128xbf16>
    %cst_64 = arith.constant dense<0.000000e+00> : vector<2x128xf32>
    %192 = tpu.matmul %190, %191, %cst_64 {dimension_numbers = #tpu.dot_dimension_numbers<[1], [0], [0], [1], [0, 0, 1, 1], [], []>} : vector<2x256xbf16>, vector<256x128xbf16>, vector<2x128xf32> -> vector<2x128xf32>
    %c0_65 = arith.constant 0 : index
    %c0_66 = arith.constant 0 : index
    %193 = vector.load %arg5[%c0_65, %c0_66] : memref<1x128xf32, #tpu.memory_space<vmem>>, vector<1x128xf32>
    %194 = vector.broadcast %193 : vector<1x128xf32> to vector<2x128xf32>
    %195 = arith.addf %192, %194 : vector<2x128xf32>
    %c0_67 = arith.constant 0 : index
    %c0_68 = arith.constant 0 : index
    %196 = vector.load %arg14[%c0_67, %c0_68] : memref<2x128xf32, #tpu.memory_space<vmem>>, vector<2x128xf32>
    tpu.vector_store %arg14[%c0_67, %c0_68], %195 {strides = array<i32>} : memref<2x128xf32, #tpu.memory_space<vmem>>, vector<2x128xf32>,
    return
  }
}

</mosaic_0001>

<llo_original>
// kernel: _forward.1
$region0: #{_forward.1}
  #allocation0 [shape = 'u32[]', space=smem, size = 0x4, offset = 0x4, fixed_abs, tag = 'smem constant byte address 0x4 - core index']
  #allocation1 [shape = 'u32[72,128]{1,0:T(1,128)}', space=vmem, size = 0x9000, scoped, tag = 'internal scratch']
  %s0 = inlined_call_operand.vmem [shape: f32[16,32], index: 0, kind: input, shape index: {}]
  %s1 = inlined_call_operand.vmem [shape: f32[2,1,8], index: 1, kind: input, shape index: {}]
  %s2 = inlined_call_operand.vmem [shape: f32[11,32], index: 2, kind: input, shape index: {}]
  %s3 = inlined_call_operand.vmem [shape: f32[1,64], index: 3, kind: input, shape index: {}]
  %s4 = inlined_call_operand.vmem [shape: f32[1,256], index: 4, kind: input, shape index: {}]
  %s5 = inlined_call_operand.vmem [shape: f32[1,128], index: 5, kind: input, shape index: {}]
  %s6 = inlined_call_operand.vmem [shape: bf16[32,32], index: 6, kind: input, shape index: {}]
  %s7 = inlined_call_operand.vmem [shape: bf16[32,32], index: 7, kind: input, shape index: {}]
  %s8 = inlined_call_operand.vmem [shape: bf16[32,32], index: 8, kind: input, shape index: {}]
  %s9 = inlined_call_operand.vmem [shape: bf16[32,32], index: 9, kind: input, shape index: {}]
  %s10 = inlined_call_operand.vmem [shape: bf16[32,64], index: 10, kind: input, shape index: {}]
  %s11 = inlined_call_operand.vmem [shape: bf16[64,32], index: 11, kind: input, shape index: {}]
  %s12 = inlined_call_operand.vmem [shape: bf16[32,256], index: 12, kind: input, shape index: {}]
  %s13 = inlined_call_operand.vmem [shape: bf16[256,128], index: 13, kind: input, shape index: {}]
  %s14 = inlined_call_operand.hbm [shape: f32[2,128], index: 14, kind: output, shape index: {}]
  %s15 = sld [smem:[#allocation0]]
  $region66: #{_forward.1} parent=0
    _
  %s17 = ssub.s32 1, %s15
  %s18 = scalar_select 0, %s17, %s15
  $region1: #{_forward.1} parent=0
    #allocation2 [shape = 'u8[1024]{0}', space=vmem, size = 0x400, scoped, tag = 'output window, operand 0, single buffered']
    #allocation3 [shape = 's32[1]{0}', space=sflag, size = 0x4, scoped, tag = 'scoped memory for _forward.1']
    %19 = vsyncpa [#allocation3], 0
    // Predicated region
    $region2: #{_forward.1} parent=1 // pred_check
      _
    $region3: #{_forward.1} parent=1 // pred_check_branch
      %21 = sbr.rel (0) target = $region5
    $region4: #{_forward.1} parent=1 // pred_region
      _
    $region5: #{_forward.1} parent=1 // pred_fallthru
      _
    // Predicated region
    $region6: #{_forward.1} parent=1 // pred_check
      _
    $region7: #{_forward.1} parent=1 // pred_check_branch
      %23 = sbr.rel (0) target = $region9
    $region8: #{_forward.1} parent=1 // pred_region
      _
    $region9: #{_forward.1} parent=1 // pred_fallthru
      _
    // Predicated region
    $region10: #{_forward.1} parent=1 // pred_check
      _
    $region11: #{_forward.1} parent=1 // pred_check_branch
      %25 = sbr.rel (0) target = $region13
    $region12: #{_forward.1} parent=1 // pred_region
      _
    $region13: #{_forward.1} parent=1 // pred_fallthru
      _
    // Predicated region
    $region14: #{_forward.1} parent=1 // pred_check
      _
    $region15: #{_forward.1} parent=1 // pred_check_branch
      %27 = sbr.rel (0) target = $region17
    $region16: #{_forward.1} parent=1 // pred_region
      _
    $region17: #{_forward.1} parent=1 // pred_fallthru
      _
    // Predicated region
    $region18: #{_forward.1} parent=1 // pred_check
      _
    $region19: #{_forward.1} parent=1 // pred_check_branch
      %29 = sbr.rel (0) target = $region21
    $region20: #{_forward.1} parent=1 // pred_region
      _
    $region21: #{_forward.1} parent=1 // pred_fallthru
      _
    // Predicated region
    $region22: #{_forward.1} parent=1 // pred_check
      _
    $region23: #{_forward.1} parent=1 // pred_check_branch
      %31 = sbr.rel (0) target = $region25
    $region24: #{_forward.1} parent=1 // pred_region
      _
    $region25: #{_forward.1} parent=1 // pred_fallthru
      _
    // Predicated region
    $region26: #{_forward.1} parent=1 // pred_check
      _
    $region27: #{_forward.1} parent=1 // pred_check_branch
      %33 = sbr.rel (0) target = $region29
    $region28: #{_forward.1} parent=1 // pred_region
      _
    $region29: #{_forward.1} parent=1 // pred_fallthru
      _
    // Predicated region
    $region30: #{_forward.1} parent=1 // pred_check
      _
    $region31: #{_forward.1} parent=1 // pred_check_branch
      %35 = sbr.rel (0) target = $region33
    $region32: #{_forward.1} parent=1 // pred_region
      _
    $region33: #{_forward.1} parent=1 // pred_fallthru
      _
    // Predicated region
    $region34: #{_forward.1} parent=1 // pred_check
      _
    $region35: #{_forward.1} parent=1 // pred_check_branch
      %37 = sbr.rel (0) target = $region37
    $region36: #{_forward.1} parent=1 // pred_region
      _
    $region37: #{_forward.1} parent=1 // pred_fallthru
      _
    // Predicated region
    $region38: #{_forward.1} parent=1 // pred_check
      _
    $region39: #{_forward.1} parent=1 // pred_check_branch
      %39 = sbr.rel (0) target = $region41
    $region40: #{_forward.1} parent=1 // pred_region
      _
    $region41: #{_forward.1} parent=1 // pred_fallthru
      _
    // Predicated region
    $region42: #{_forward.1} parent=1 // pred_check
      _
    $region43: #{_forward.1} parent=1 // pred_check_branch
      %41 = sbr.rel (0) target = $region45
    $region44: #{_forward.1} parent=1 // pred_region
      _
    $region45: #{_forward.1} parent=1 // pred_fallthru
      _
    // Predicated region
    $region46: #{_forward.1} parent=1 // pred_check
      _
    $region47: #{_forward.1} parent=1 // pred_check_branch
      %43 = sbr.rel (0) target = $region49
    $region48: #{_forward.1} parent=1 // pred_region
      _
    $region49: #{_forward.1} parent=1 // pred_fallthru
      _
    // Predicated region
    $region50: #{_forward.1} parent=1 // pred_check
      _
    $region51: #{_forward.1} parent=1 // pred_check_branch
      %45 = sbr.rel (0) target = $region53
    $region52: #{_forward.1} parent=1 // pred_region
      _
    $region53: #{_forward.1} parent=1 // pred_fallthru
      _
    // Predicated region
    $region54: #{_forward.1} parent=1 // pred_check
      _
    $region55: #{_forward.1} parent=1 // pred_check_branch
      %47 = sbr.rel (0) target = $region57
    $region56: #{_forward.1} parent=1 // pred_region
      _
    $region57: #{_forward.1} parent=1 // pred_fallthru
      _
    %v49 = vld [vmem:[%s2] sm:$0xff]
    %v50 = vld [vmem:[%s2 + $0x8] sm:$0x7]
    %v51 = vld [vmem:[%s0] sm:$0xff]
    %v52 = vld [vmem:[%s0 + $0x8] sm:$0xff]
    %vm53 = vcmask 261120
    %v54 = vsel %vm53, %v51, 0.0
    %55 = vadd.xlane.f32.xlu0 %v54
    %v56 = vpop.xlane.xlu0 %55
    %v57 = vsel %vm53, %v52, 0.0
    %58 = vadd.xlane.f32.xlu0 %v57
    %v59 = vpop.xlane.xlu0 %58
    %v60 = vrcp.pop 32.0
    %v61 = vmul.f32 32.0, %v60
    %v62 = vsub.f32 1.0, %v61
    %v63 = vmul.f32 %v60, %v62
    %v64 = vadd.f32 %v60, %v63
    %vm65 = vweird.f32 %v60
    %v66 = vsel %vm65, %v60, %v64
    %v67 = vmul.f32 %v56, %v66
    %v68 = vmul.f32 %v59, %v66
    %v69 = vsub.f32 %v51, %v67
    %v70 = vsub.f32 %v52, %v68
    %v71 = vmul.f32 %v69, %v69
    %v72 = vmul.f32 %v70, %v70
    %v73 = vsel %vm53, %v71, 0.0
    %74 = vadd.xlane.f32.xlu0 %v73
    %v75 = vpop.xlane.xlu0 %74
    %v76 = vsel %vm53, %v72, 0.0
    %77 = vadd.xlane.f32.xlu0 %v76
    %v78 = vpop.xlane.xlu0 %77
    %v79 = vmul.f32 %v75, %v66
    %v80 = vmul.f32 %v78, %v66
    %v81 = vadd.f32 %v79, 1e-12
    %v82 = vadd.f32 %v80, 1e-12
    %v83 = vrsqrt.pop %v81
    %v84 = vmul.f32 %v83, %v81
    %v85 = vmul.f32 %v84, %v83
    %v86 = vmul.f32 0.5, %v85
    %v87 = vsub.f32 1.5, %v86
    %v88 = vmul.f32 %v83, %v87
    %vm89 = vweird.f32 %v81
    %vm90 = vweird.f32 %v83
    %vm91 = vmor %vm89, %vm90
    %v92 = vsel %vm91, %v83, %v88
    %v93 = vrsqrt.pop %v82
    %v94 = vmul.f32 %v93, %v82
    %v95 = vmul.f32 %v94, %v93
    %v96 = vmul.f32 0.5, %v95
    %v97 = vsub.f32 1.5, %v96
    %v98 = vmul.f32 %v93, %v97
    %vm99 = vweird.f32 %v82
    %vm100 = vweird.f32 %v93
    %vm101 = vmor %vm99, %vm100
    %v102 = vsel %vm101, %v93, %v98
    %v103 = vmul.f32 %v69, %v92
    %v104 = vmul.f32 %v70, %v102
    %v105 = vperm.slane %v49, 0
    %v106 = vmul.f32 %v103, %v105
    %v107 = vmul.f32 %v104, %v105
    %v108 = vperm.slane %v49, 1
    %v109 = vadd.f32 %v106, %v108
    %v110 = vadd.f32 %v107, %v108
    %v111 = vpack.c.bf16 %v110, %v109
    %v112 = vld [vmem:[%s6] sm:$0xf]
    %v113 = vld [vmem:[%s6 + $0x4] sm:$0xf]
    %v114 = vld [vmem:[%s6 + $0x8] sm:$0xf]
    %v115 = vld [vmem:[%s6 + $0xc] sm:$0xf]
    %v116 = vperm.slane %v49, 2
    %v121 = vunpack.c.l.b16 %v112
    %v122 = vunpack.c.l.b16 %v113
    %v123 = vunpack.c.l.b16 %v114
    %v124 = vunpack.c.l.b16 %v115
    %v125 = vpack.c.b16 %v122, %v121
    %v126 = vpack.c.b16 %v124, %v123
    %v130 = vsel %vm53, %v111, 0
    %132 = vmatpush.bf16.msra.mxu0 0
    %133 = vmatpush.bf16.msra.mxu0 0
    %134 = vmatpush.bf16.msra.mxu0 0
    %135 = vmatpush.bf16.msra.mxu0 0
    %136 = vmatpush.bf16.msra.mxu0 0
    %137 = vmatpush.bf16.msra.mxu0 0
    %138 = vmatpush.bf16.msra.mxu0 %v126
    %139 = vmatpush.bf16.msra.mxu0 %v125
    %140 = vmatmul.bf16.gmra.mxu0 %v130
    %v141 = vpop.f32.mrf.mxu0
    %v142 = vadd.f32 %v116, %v141
    %v143 = vpop.f32.mrf.mxu0
    %v144 = vadd.f32 %v116, %v143
    %145 = vdwg.mxu0
    %v146 = vld [vmem:[%s7] sm:$0xf]
    %v147 = vld [vmem:[%s7 + $0x4] sm:$0xf]
    %v148 = vld [vmem:[%s7 + $0x8] sm:$0xf]
    %v149 = vld [vmem:[%s7 + $0xc] sm:$0xf]
    %v150 = vperm.slane %v49, 3
    %v155 = vunpack.c.l.b16 %v146
    %v156 = vunpack.c.l.b16 %v147
    %v157 = vunpack.c.l.b16 %v148
    %v158 = vunpack.c.l.b16 %v149
    %v159 = vpack.c.b16 %v156, %v155
    %v160 = vpack.c.b16 %v158, %v157
    %163 = vmatpush.bf16.msra.mxu0 0
    %164 = vmatpush.bf16.msra.mxu0 0
    %165 = vmatpush.bf16.msra.mxu0 0
    %166 = vmatpush.bf16.msra.mxu0 0
    %167 = vmatpush.bf16.msra.mxu0 0
    %168 = vmatpush.bf16.msra.mxu0 0
    %169 = vmatpush.bf16.msra.mxu0 %v160
    %170 = vmatpush.bf16.msra.mxu0 %v159
    %171 = vmatmul.bf16.gmra.mxu0 %v130
    %v172 = vpop.f32.mrf.mxu0
    %v173 = vadd.f32 %v150, %v172
    %v174 = vpop.f32.mrf.mxu0
    %v175 = vadd.f32 %v150, %v174
    %176 = vdwg.mxu0
    %v177 = vld [vmem:[%s8] sm:$0xf]
    %v178 = vld [vmem:[%s8 + $0x4] sm:$0xf]
    %v179 = vld [vmem:[%s8 + $0x8] sm:$0xf]
    %v180 = vld [vmem:[%s8 + $0xc] sm:$0xf]
    %v181 = vperm.slane %v49, 4
    %v186 = vunpack.c.l.b16 %v177
    %v187 = vunpack.c.l.b16 %v178
    %v188 = vunpack.c.l.b16 %v179
    %v189 = vunpack.c.l.b16 %v180
    %v190 = vpack.c.b16 %v187, %v186
    %v191 = vpack.c.b16 %v189, %v188
    %194 = vmatpush.bf16.msra.mxu0 0
    %195 = vmatpush.bf16.msra.mxu0 0
    %196 = vmatpush.bf16.msra.mxu0 0
    %197 = vmatpush.bf16.msra.mxu0 0
    %198 = vmatpush.bf16.msra.mxu0 0
    %199 = vmatpush.bf16.msra.mxu0 0
    %200 = vmatpush.bf16.msra.mxu0 %v191
    %201 = vmatpush.bf16.msra.mxu0 %v190
    %202 = vmatmul.bf16.gmra.mxu0 %v130
    %v203 = vpop.f32.mrf.mxu0
    %v204 = vadd.f32 %v181, %v203
    %v205 = vpop.f32.mrf.mxu0
    %v206 = vadd.f32 %v181, %v205
    %207 = vdwg.mxu0
    %v208 = vld [vmem:[%s1] sm:$0x1]
    %v209 = vld [vmem:[%s1 + $0x1] sm:$0x1]
    %v210 = vpack.c.bf16 %v142, %v142
    %v211 = vpack.c.bf16 %v144, %v144
    %v212 = vpack.c.bf16 %v173, %v173
    %v213 = vpack.c.bf16 %v175, %v175
    %v214 = vpack.c.bf16 %v204, %v204
    %v215 = vpack.c.bf16 %v206, %v206
    %vm216 = vcmask 130048
    %v218 = vsel %vm216, %v210, 0
    %v221 = vsel %vm216, %v212, 0
    %223 = vmatpush.bf16.xpose.msra.mxu0 0
    %224 = vmatpush.bf16.xpose.msra.mxu0 0
    %225 = vmatpush.bf16.xpose.msra.mxu0 0
    %226 = vmatpush.bf16.xpose.msra.mxu0 0
    %227 = vmatpush.bf16.xpose.msra.mxu0 0
    %228 = vmatpush.bf16.xpose.msra.mxu0 0
    %229 = vmatpush.bf16.xpose.msra.mxu0 0
    %230 = vmatpush.bf16.xpose.msra.mxu0 %v221
    %231 = vmatmul.bf16.gmra.mxu0 %v218
    %v232 = vpop.f32.mrf.mxu0
    %v233 = vadd.f32 0.0, %v232
    %v234 = vpop.f32.mrf.mxu0
    %235 = vdwg.mxu0
    %v237 = vsel %vm216, %v211, 0
    %v240 = vsel %vm216, %v213, 0
    %242 = vmatpush.bf16.xpose.msra.mxu0 0
    %243 = vmatpush.bf16.xpose.msra.mxu0 0
    %244 = vmatpush.bf16.xpose.msra.mxu0 0
    %245 = vmatpush.bf16.xpose.msra.mxu0 0
    %246 = vmatpush.bf16.xpose.msra.mxu0 0
    %247 = vmatpush.bf16.xpose.msra.mxu0 0
    %248 = vmatpush.bf16.xpose.msra.mxu0 0
    %249 = vmatpush.bf16.xpose.msra.mxu0 %v240
    %250 = vmatmul.bf16.gmra.mxu0 %v237
    %v251 = vpop.f32.mrf.mxu0
    %v252 = vadd.f32 0.0, %v251
    %v253 = vpop.f32.mrf.mxu0
    %254 = vdwg.mxu0
    %v255 = vmul.f32 %v233, 0.25
    %v256 = vmul.f32 %v252, 0.25
    %v259 = vperm.slane %v208, 0
    %v260 = vperm.slane %v209, 0
    %v263 = vadd.f32 %v255, %v259
    %v264 = vadd.f32 %v256, %v260
    %vm265 = vcmask 64512
    %v266 = vsel %vm265, %v263, -inf
    %267 = vmax.xlane.f32.xlu0 %v266
    %v268 = vpop.xlane.xlu0 %267
    %v269 = vsel %vm265, %v264, -inf
    %270 = vmax.xlane.f32.xlu0 %v269
    %v271 = vpop.xlane.xlu0 %270
    %v272 = vsub.f32 %v263, %v268
    %v273 = vsub.f32 %v264, %v271
    %v274 = vmul.f32 %v272, 1.442695
    %v275 = vpow.pop %v274
    %v276 = vmul.f32 %v273, 1.442695
    %v277 = vpow.pop %v276
    %v278 = vsel %vm265, %v275, 0.0
    %279 = vadd.xlane.f32.xlu0 %v278
    %v280 = vpop.xlane.xlu0 %279
    %v281 = vsel %vm265, %v277, 0.0
    %282 = vadd.xlane.f32.xlu0 %v281
    %v283 = vpop.xlane.xlu0 %282
    %v284 = vrcp.pop %v280
    %v285 = vrcp.pop %v283
    %v286 = vmul.f32 %v275, %v284
    %v287 = vmul.f32 %v277, %v285
    %v288 = vpack.c.bf16 %v286, %v286
    %v289 = vpack.c.bf16 %v287, %v287
    %v291 = vsel %vm265, %v288, 0
    %vm293 = vcmask 1043456
    %v295 = vsel %vm293, %v214, 0
    %297 = vmatpush.bf16.msra.mxu0 0
    %298 = vmatpush.bf16.msra.mxu0 0
    %299 = vmatpush.bf16.msra.mxu0 0
    %300 = vmatpush.bf16.msra.mxu0 0
    %301 = vmatpush.bf16.msra.mxu0 0
    %302 = vmatpush.bf16.msra.mxu0 0
    %303 = vmatpush.bf16.msra.mxu0 0
    %304 = vmatpush.bf16.msra.mxu0 %v295
    %305 = vmatmul.bf16.gmra.mxu0 %v291
    %v306 = vpop.f32.mrf.mxu0
    %v307 = vadd.f32 0.0, %v306
    %v308 = vpop.f32.mrf.mxu0
    %309 = vdwg.mxu0
    %v311 = vsel %vm265, %v289, 0
    %v314 = vsel %vm293, %v215, 0
    %316 = vmatpush.bf16.msra.mxu0 0
    %317 = vmatpush.bf16.msra.mxu0 0
    %318 = vmatpush.bf16.msra.mxu0 0
    %319 = vmatpush.bf16.msra.mxu0 0
    %320 = vmatpush.bf16.msra.mxu0 0
    %321 = vmatpush.bf16.msra.mxu0 0
    %322 = vmatpush.bf16.msra.mxu0 0
    %323 = vmatpush.bf16.msra.mxu0 %v314
    %324 = vmatmul.bf16.gmra.mxu0 %v311
    %v325 = vpop.f32.mrf.mxu0
    %v326 = vadd.f32 0.0, %v325
    %v327 = vpop.f32.mrf.mxu0
    %328 = vdwg.mxu0
    %v329 = vld [vmem:[%s9] sm:$0xf]
    %v330 = vld [vmem:[%s9 + $0x4] sm:$0xf]
    %v331 = vpack.c.bf16 %v326, %v307
    %v333 = vunpack.c.l.b16 %v210
    %v334 = vpack.c.b16 %v333, %v333
    %335 = vrot.lane.b32.xlu0 %v334, 112
    %v336 = vpop.permute.xlu0 %335
    %v338 = vunpack.c.l.b16 %v212
    %v339 = vpack.c.b16 %v338, %v338
    %340 = vrot.lane.b32.xlu0 %v339, 112
    %v341 = vpop.permute.xlu0 %340
    %v343 = vsel %vm216, %v336, 0
    %v346 = vsel %vm216, %v341, 0
    %348 = vmatpush.bf16.xpose.msra.mxu0 0
    %349 = vmatpush.bf16.xpose.msra.mxu0 0
    %350 = vmatpush.bf16.xpose.msra.mxu0 0
    %351 = vmatpush.bf16.xpose.msra.mxu0 0
    %352 = vmatpush.bf16.xpose.msra.mxu0 0
    %353 = vmatpush.bf16.xpose.msra.mxu0 0
    %354 = vmatpush.bf16.xpose.msra.mxu0 0
    %355 = vmatpush.bf16.xpose.msra.mxu0 %v346
    %356 = vmatmul.bf16.gmra.mxu0 %v343
    %v357 = vpop.f32.mrf.mxu0
    %v358 = vadd.f32 0.0, %v357
    %v359 = vpop.f32.mrf.mxu0
    %360 = vdwg.mxu0
    %v362 = vunpack.c.l.b16 %v211
    %v363 = vpack.c.b16 %v362, %v362
    %364 = vrot.lane.b32.xlu0 %v363, 112
    %v365 = vpop.permute.xlu0 %364
    %v367 = vunpack.c.l.b16 %v213
    %v368 = vpack.c.b16 %v367, %v367
    %369 = vrot.lane.b32.xlu0 %v368, 112
    %v370 = vpop.permute.xlu0 %369
    %v372 = vsel %vm216, %v365, 0
    %v375 = vsel %vm216, %v370, 0
    %377 = vmatpush.bf16.xpose.msra.mxu0 0
    %378 = vmatpush.bf16.xpose.msra.mxu0 0
    %379 = vmatpush.bf16.xpose.msra.mxu0 0
    %380 = vmatpush.bf16.xpose.msra.mxu0 0
    %381 = vmatpush.bf16.xpose.msra.mxu0 0
    %382 = vmatpush.bf16.xpose.msra.mxu0 0
    %383 = vmatpush.bf16.xpose.msra.mxu0 0
    %384 = vmatpush.bf16.xpose.msra.mxu0 %v375
    %385 = vmatmul.bf16.gmra.mxu0 %v372
    %v386 = vpop.f32.mrf.mxu0
    %v387 = vadd.f32 0.0, %v386
    %v388 = vpop.f32.mrf.mxu0
    %389 = vdwg.mxu0
    %v390 = vmul.f32 %v358, 0.25
    %v391 = vmul.f32 %v387, 0.25
    %v392 = vadd.f32 %v390, %v259
    %v393 = vadd.f32 %v391, %v260
    %v394 = vsel %vm265, %v392, -inf
    %395 = vmax.xlane.f32.xlu0 %v394
    %v396 = vpop.xlane.xlu0 %395
    %v397 = vsel %vm265, %v393, -inf
    %398 = vmax.xlane.f32.xlu0 %v397
    %v399 = vpop.xlane.xlu0 %398
    %v400 = vsub.f32 %v392, %v396
    %v401 = vsub.f32 %v393, %v399
    %v402 = vmul.f32 %v400, 1.442695
    %v403 = vpow.pop %v402
    %v404 = vmul.f32 %v401, 1.442695
    %v405 = vpow.pop %v404
    %v406 = vsel %vm265, %v403, 0.0
    %407 = vadd.xlane.f32.xlu0 %v406
    %v408 = vpop.xlane.xlu0 %407
    %v409 = vsel %vm265, %v405, 0.0
    %410 = vadd.xlane.f32.xlu0 %v409
    %v411 = vpop.xlane.xlu0 %410
    %v412 = vrcp.pop %v408
    %v413 = vrcp.pop %v411
    %v414 = vmul.f32 %v403, %v412
    %v415 = vmul.f32 %v405, %v413
    %v416 = vpack.c.bf16 %v414, %v414
    %v417 = vpack.c.bf16 %v415, %v415
    %v419 = vunpack.c.l.b16 %v214
    %v420 = vpack.c.b16 %v419, %v419
    %421 = vrot.lane.b32.xlu0 %v420, 112
    %v422 = vpop.permute.xlu0 %421
    %v424 = vsel %vm265, %v416, 0
    %v427 = vsel %vm293, %v422, 0
    %429 = vmatpush.bf16.msra.mxu0 0
    %430 = vmatpush.bf16.msra.mxu0 0
    %431 = vmatpush.bf16.msra.mxu0 0
    %432 = vmatpush.bf16.msra.mxu0 0
    %433 = vmatpush.bf16.msra.mxu0 0
    %434 = vmatpush.bf16.msra.mxu0 0
    %435 = vmatpush.bf16.msra.mxu0 0
    %436 = vmatpush.bf16.msra.mxu0 %v427
    %437 = vmatmul.bf16.gmra.mxu0 %v424
    %v438 = vpop.f32.mrf.mxu0
    %v439 = vadd.f32 0.0, %v438
    %v440 = vpop.f32.mrf.mxu0
    %441 = vdwg.mxu0
    %v443 = vunpack.c.l.b16 %v215
    %v444 = vpack.c.b16 %v443, %v443
    %445 = vrot.lane.b32.xlu0 %v444, 112
    %v446 = vpop.permute.xlu0 %445
    %v448 = vsel %vm265, %v417, 0
    %v451 = vsel %vm293, %v446, 0
    %453 = vmatpush.bf16.msra.mxu0 0
    %454 = vmatpush.bf16.msra.mxu0 0
    %455 = vmatpush.bf16.msra.mxu0 0
    %456 = vmatpush.bf16.msra.mxu0 0
    %457 = vmatpush.bf16.msra.mxu0 0
    %458 = vmatpush.bf16.msra.mxu0 0
    %459 = vmatpush.bf16.msra.mxu0 0
    %460 = vmatpush.bf16.msra.mxu0 %v451
    %461 = vmatmul.bf16.gmra.mxu0 %v448
    %v462 = vpop.f32.mrf.mxu0
    %v463 = vadd.f32 0.0, %v462
    %v464 = vpop.f32.mrf.mxu0
    %465 = vdwg.mxu0
    %v466 = vld [vmem:[%s9 + $0x8] sm:$0xf]
    %v467 = vld [vmem:[%s9 + $0xc] sm:$0xf]
    %v468 = vpack.c.bf16 %v463, %v439
    %v471 = vunpack.c.l.b16 %v466
    %v472 = vunpack.c.l.b16 %v467
    %v473 = vpack.c.b16 %v472, %v471
    %v476 = vsel %vm216, %v468, 0
    %478 = vmatpush.bf16.msra.mxu0 0
    %479 = vmatpush.bf16.msra.mxu0 0
    %480 = vmatpush.bf16.msra.mxu0 0
    %481 = vmatpush.bf16.msra.mxu0 0
    %482 = vmatpush.bf16.msra.mxu0 0
    %483 = vmatpush.bf16.msra.mxu0 0
    %484 = vmatpush.bf16.msra.mxu0 0
    %485 = vmatpush.bf16.msra.mxu0 %v473
    %486 = vmatmul.bf16.gmra.mxu0 %v476
    %v487 = vpop.f32.mrf.mxu0
    %v488 = vadd.f32 0.0, %v487
    %v489 = vpop.f32.mrf.mxu0
    %v490 = vadd.f32 0.0, %v489
    %491 = vdwg.mxu0
    %v494 = vunpack.c.l.b16 %v329
    %v495 = vunpack.c.l.b16 %v330
    %v496 = vpack.c.b16 %v495, %v494
    %v499 = vsel %vm216, %v331, 0
    %501 = vmatpush.bf16.msra.mxu0 0
    %502 = vmatpush.bf16.msra.mxu0 0
    %503 = vmatpush.bf16.msra.mxu0 0
    %504 = vmatpush.bf16.msra.mxu0 0
    %505 = vmatpush.bf16.msra.mxu0 0
    %506 = vmatpush.bf16.msra.mxu0 0
    %507 = vmatpush.bf16.msra.mxu0 0
    %508 = vmatpush.bf16.msra.mxu0 %v496
    %509 = vmatmul.bf16.gmra.mxu0 %v499
    %v510 = vpop.f32.mrf.mxu0
    %v511 = vadd.f32 %v488, %v510
    %v512 = vpop.f32.mrf.mxu0
    %v513 = vadd.f32 %v490, %v512
    %514 = vdwg.mxu0
    %v515 = vperm.slane %v49, 5
    %v516 = vadd.f32 %v511, %v515
    %v517 = vadd.f32 %v513, %v515
    %v518 = vadd.f32 %v109, %v516
    %v519 = vadd.f32 %v110, %v517
    %v520 = vsel %vm53, %v518, 0.0
    %521 = vadd.xlane.f32.xlu0 %v520
    %v522 = vpop.xlane.xlu0 %521
    %v523 = vsel %vm53, %v519, 0.0
    %524 = vadd.xlane.f32.xlu0 %v523
    %v525 = vpop.xlane.xlu0 %524
    %v526 = vmul.f32 %v522, %v66
    %v527 = vmul.f32 %v525, %v66
    %v528 = vsub.f32 %v518, %v526
    %v529 = vsub.f32 %v519, %v527
    %v530 = vmul.f32 %v528, %v528
    %v531 = vmul.f32 %v529, %v529
    %v532 = vsel %vm53, %v530, 0.0
    %533 = vadd.xlane.f32.xlu0 %v532
    %v534 = vpop.xlane.xlu0 %533
    %v535 = vsel %vm53, %v531, 0.0
    %536 = vadd.xlane.f32.xlu0 %v535
    %v537 = vpop.xlane.xlu0 %536
    %v538 = vmul.f32 %v534, %v66
    %v539 = vmul.f32 %v537, %v66
    %v540 = vadd.f32 %v538, 1e-12
    %v541 = vadd.f32 %v539, 1e-12
    %v542 = vrsqrt.pop %v540
    %v543 = vmul.f32 %v542, %v540
    %v544 = vmul.f32 %v543, %v542
    %v545 = vmul.f32 0.5, %v544
    %v546 = vsub.f32 1.5, %v545
    %v547 = vmul.f32 %v542, %v546
    %vm548 = vweird.f32 %v540
    %vm549 = vweird.f32 %v542
    %vm550 = vmor %vm548, %vm549
    %v551 = vsel %vm550, %v542, %v547
    %v552 = vrsqrt.pop %v541
    %v553 = vmul.f32 %v552, %v541
    %v554 = vmul.f32 %v553, %v552
    %v555 = vmul.f32 0.5, %v554
    %v556 = vsub.f32 1.5, %v555
    %v557 = vmul.f32 %v552, %v556
    %vm558 = vweird.f32 %v541
    %vm559 = vweird.f32 %v552
    %vm560 = vmor %vm558, %vm559
    %v561 = vsel %vm560, %v552, %v557
    %v562 = vmul.f32 %v528, %v551
    %v563 = vmul.f32 %v529, %v561
    %v564 = vperm.slane %v49, 6
    %v565 = vmul.f32 %v562, %v564
    %v566 = vmul.f32 %v563, %v564
    %v567 = vperm.slane %v49, 7
    %v568 = vadd.f32 %v565, %v567
    %v569 = vadd.f32 %v566, %v567
    %v570 = vpack.c.bf16 %v569, %v568
    %v571 = vld [vmem:[%s10] sm:$0xf]
    %v572 = vld [vmem:[%s10 + $0x4] sm:$0xf]
    %v573 = vld [vmem:[%s10 + $0x8] sm:$0xf]
    %v574 = vld [vmem:[%s10 + $0xc] sm:$0xf]
    %v575 = vld [vmem:[%s3] sm:$0x1]
    %v577 = vperm.slane %v575, 0
    %v583 = vunpack.c.l.b16 %v571
    %v584 = vunpack.c.l.b16 %v572
    %v585 = vunpack.c.l.b16 %v573
    %v586 = vunpack.c.l.b16 %v574
    %v587 = vpack.c.b16 %v584, %v583
    %v588 = vpack.c.b16 %v586, %v585
    %v592 = vsel %vm53, %v570, 0
    %594 = vmatpush.bf16.msra.mxu0 0
    %595 = vmatpush.bf16.msra.mxu0 0
    %596 = vmatpush.bf16.msra.mxu0 0
    %597 = vmatpush.bf16.msra.mxu0 0
    %598 = vmatpush.bf16.msra.mxu0 0
    %599 = vmatpush.bf16.msra.mxu0 0
    %600 = vmatpush.bf16.msra.mxu0 %v588
    %601 = vmatpush.bf16.msra.mxu0 %v587
    %602 = vmatmul.bf16.gmra.mxu0 %v592
    %v603 = vpop.f32.mrf.mxu0
    %v604 = vadd.f32 %v577, %v603
    %v605 = vpop.f32.mrf.mxu0
    %v606 = vadd.f32 %v577, %v605
    %607 = vdwg.mxu0
    %v608 = vmul.f32 %v604, 0.5
    %v609 = vmul.f32 %v606, 0.5
    %v610 = vmul.f32 %v604, 0.044715
    %v611 = vmul.f32 %v606, 0.044715
    %v612 = vmul.f32 %v610, %v604
    %v613 = vmul.f32 %v611, %v606
    %v614 = vmul.f32 %v612, %v604
    %v615 = vmul.f32 %v613, %v606
    %v616 = vadd.f32 %v604, %v614
    %v617 = vadd.f32 %v606, %v615
    %v618 = vmul.f32 %v616, 0.7978846
    %v619 = vmul.f32 %v617, 0.7978846
    %v620 = vtanh.pop %v618
    %v621 = vtanh.pop %v619
    %v622 = vadd.f32 %v620, 1.0
    %v623 = vadd.f32 %v621, 1.0
    %v624 = vmul.f32 %v608, %v622
    %v625 = vmul.f32 %v609, %v623
    %v626 = vpack.c.bf16 %v625, %v624
    %v627 = vld [vmem:[%s11] sm:$0xf]
    %v628 = vld [vmem:[%s11 + $0x4] sm:$0xf]
    %v629 = vld [vmem:[%s11 + $0x8] sm:$0xf]
    %v630 = vld [vmem:[%s11 + $0xc] sm:$0xf]
    %v631 = vld [vmem:[%s11 + $0x10] sm:$0xf]
    %v632 = vld [vmem:[%s11 + $0x14] sm:$0xf]
    %v633 = vld [vmem:[%s11 + $0x18] sm:$0xf]
    %v634 = vld [vmem:[%s11 + $0x1c] sm:$0xf]
    %v635 = vperm.slane %v50, 0
    %v644 = vunpack.c.l.b16 %v627
    %v645 = vunpack.c.l.b16 %v628
    %v646 = vunpack.c.l.b16 %v629
    %v647 = vunpack.c.l.b16 %v630
    %v648 = vunpack.c.l.b16 %v631
    %v649 = vunpack.c.l.b16 %v632
    %v650 = vunpack.c.l.b16 %v633
    %v651 = vunpack.c.l.b16 %v634
    %v652 = vpack.c.b16 %v645, %v644
    %v653 = vpack.c.b16 %v647, %v646
    %v654 = vpack.c.b16 %v649, %v648
    %v655 = vpack.c.b16 %v651, %v650
    %vm660 = vcmask 523264
    %v662 = vsel %vm660, %v626, 0
    %664 = vmatpush.bf16.msra.mxu0 0
    %665 = vmatpush.bf16.msra.mxu0 0
    %666 = vmatpush.bf16.msra.mxu0 0
    %667 = vmatpush.bf16.msra.mxu0 0
    %668 = vmatpush.bf16.msra.mxu0 %v655
    %669 = vmatpush.bf16.msra.mxu0 %v654
    %670 = vmatpush.bf16.msra.mxu0 %v653
    %671 = vmatpush.bf16.msra.mxu0 %v652
    %672 = vmatmul.bf16.gmra.mxu0 %v662
    %v673 = vpop.f32.mrf.mxu0
    %v674 = vadd.f32 %v635, %v673
    %v675 = vpop.f32.mrf.mxu0
    %v676 = vadd.f32 %v635, %v675
    %677 = vdwg.mxu0
    %v678 = vadd.f32 %v568, %v674
    %v679 = vadd.f32 %v569, %v676
    %v680 = vsel %vm53, %v678, 0.0
    %681 = vadd.xlane.f32.xlu0 %v680
    %v682 = vpop.xlane.xlu0 %681
    %v683 = vsel %vm53, %v679, 0.0
    %684 = vadd.xlane.f32.xlu0 %v683
    %v685 = vpop.xlane.xlu0 %684
    %v686 = vmul.f32 %v682, %v66
    %v687 = vmul.f32 %v685, %v66
    %v688 = vsub.f32 %v678, %v686
    %v689 = vsub.f32 %v679, %v687
    %v690 = vmul.f32 %v688, %v688
    %v691 = vmul.f32 %v689, %v689
    %v692 = vsel %vm53, %v690, 0.0
    %693 = vadd.xlane.f32.xlu0 %v692
    %v694 = vpop.xlane.xlu0 %693
    %v695 = vsel %vm53, %v691, 0.0
    %696 = vadd.xlane.f32.xlu0 %v695
    %v697 = vpop.xlane.xlu0 %696
    %v698 = vmul.f32 %v694, %v66
    %v699 = vmul.f32 %v697, %v66
    %v700 = vadd.f32 %v698, 1e-12
    %v701 = vadd.f32 %v699, 1e-12
    %v702 = vrsqrt.pop %v700
    %v703 = vmul.f32 %v702, %v700
    %v704 = vmul.f32 %v703, %v702
    %v705 = vmul.f32 0.5, %v704
    %v706 = vsub.f32 1.5, %v705
    %v707 = vmul.f32 %v702, %v706
    %vm708 = vweird.f32 %v700
    %vm709 = vweird.f32 %v702
    %vm710 = vmor %vm708, %vm709
    %v711 = vsel %vm710, %v702, %v707
    %v712 = vrsqrt.pop %v701
    %v713 = vmul.f32 %v712, %v701
    %v714 = vmul.f32 %v713, %v712
    %v715 = vmul.f32 0.5, %v714
    %v716 = vsub.f32 1.5, %v715
    %v717 = vmul.f32 %v712, %v716
    %vm718 = vweird.f32 %v701
    %vm719 = vweird.f32 %v712
    %vm720 = vmor %vm718, %vm719
    %v721 = vsel %vm720, %v712, %v717
    %v722 = vmul.f32 %v688, %v711
    %v723 = vmul.f32 %v689, %v721
    %v724 = vperm.slane %v50, 1
    %v725 = vmul.f32 %v722, %v724
    %v726 = vmul.f32 %v723, %v724
    %v727 = vperm.slane %v50, 2
    %v728 = vadd.f32 %v725, %v727
    %v729 = vadd.f32 %v726, %v727
    %v730 = vpack.c.bf16 %v728, %v728
    %v731 = vpack.c.bf16 %v729, %v729
    %v732 = vld [vmem:[%s12] sm:$0xff]
    %v733 = vld [vmem:[%s12 + $0x8] sm:$0xff]
    %v734 = vld [vmem:[%s12 + $0x10] sm:$0xff]
    %v735 = vld [vmem:[%s12 + $0x18] sm:$0xff]
    %v736 = vld [vmem:[%s4] sm:$0x3]
    %v738 = vperm.slane %v736, 0
    %v739 = vperm.slane %v736, 1
    %v744 = vunpack.c.l.b16 %v730
    %v745 = vunpack.c.l.b16 %v731
    %v746 = vrot.slane %v745, 7
    %vm747 = vcmask 1041409
    %v748 = vsel %vm747, %v746, %v744
    %v749 = vpack.c.b16 %v748, %v748
    %v754 = vunpack.c.l.b16 %v732
    %v755 = vunpack.c.h.b16 %v732
    %v756 = vunpack.c.l.b16 %v733
    %v757 = vunpack.c.h.b16 %v733
    %v758 = vunpack.c.l.b16 %v734
    %v759 = vunpack.c.h.b16 %v734
    %v760 = vunpack.c.l.b16 %v735
    %v761 = vunpack.c.h.b16 %v735
    %v762 = vpack.c.b16 %v756, %v754
    %v763 = vpack.c.b16 %v757, %v755
    %v764 = vpack.c.b16 %v760, %v758
    %v765 = vpack.c.b16 %v761, %v759
    %v771 = vsel %vm53, %v749, 0
    %773 = vmatpush.bf16.msra.mxu0 0
    %774 = vmatpush.bf16.msra.mxu0 0
    %775 = vmatpush.bf16.msra.mxu0 0
    %776 = vmatpush.bf16.msra.mxu0 0
    %777 = vmatpush.bf16.msra.mxu0 0
    %778 = vmatpush.bf16.msra.mxu0 0
    %779 = vmatpush.bf16.msra.mxu0 %v764
    %780 = vmatpush.bf16.msra.mxu0 %v762
    %781 = vmatmul.bf16.gmra.mxu0 %v771
    %v782 = vpop.f32.mrf.mxu0
    %v783 = vadd.f32 %v738, %v782
    %v784 = vpop.f32.mrf.mxu0
    %785 = vdwg.mxu0
    %786 = vmatpush.bf16.msra.mxu0 0
    %787 = vmatpush.bf16.msra.mxu0 0
    %788 = vmatpush.bf16.msra.mxu0 0
    %789 = vmatpush.bf16.msra.mxu0 0
    %790 = vmatpush.bf16.msra.mxu0 0
    %791 = vmatpush.bf16.msra.mxu0 0
    %792 = vmatpush.bf16.msra.mxu0 %v765
    %793 = vmatpush.bf16.msra.mxu0 %v763
    %794 = vmatmul.bf16.gmra.mxu0 %v771
    %v795 = vpop.f32.mrf.mxu0
    %v796 = vadd.f32 %v739, %v795
    %v797 = vpop.f32.mrf.mxu0
    %798 = vdwg.mxu0
    %v799 = vpack.c.bf16 %v783, %v783
    %v800 = vpack.c.bf16 %v796, %v796
    %v801 = vld [vmem:[%s13] sm:$0xf]
    %v802 = vld [vmem:[%s13 + $0x4] sm:$0xf]
    %v803 = vld [vmem:[%s13 + $0x8] sm:$0xf]
    %v804 = vld [vmem:[%s13 + $0xc] sm:$0xf]
    %v805 = vld [vmem:[%s13 + $0x10] sm:$0xf]
    %v806 = vld [vmem:[%s13 + $0x14] sm:$0xf]
    %v807 = vld [vmem:[%s13 + $0x18] sm:$0xf]
    %v808 = vld [vmem:[%s13 + $0x1c] sm:$0xf]
    %v809 = vld [vmem:[%s13 + $0x20] sm:$0xf]
    %v810 = vld [vmem:[%s13 + $0x24] sm:$0xf]
    %v811 = vld [vmem:[%s13 + $0x28] sm:$0xf]
    %v812 = vld [vmem:[%s13 + $0x2c] sm:$0xf]
    %v813 = vld [vmem:[%s13 + $0x30] sm:$0xf]
    %v814 = vld [vmem:[%s13 + $0x34] sm:$0xf]
    %v815 = vld [vmem:[%s13 + $0x38] sm:$0xf]
    %v816 = vld [vmem:[%s13 + $0x3c] sm:$0xf]
    %v817 = vld [vmem:[%s13 + $0x40] sm:$0xf]
    %v818 = vld [vmem:[%s13 + $0x44] sm:$0xf]
    %v819 = vld [vmem:[%s13 + $0x48] sm:$0xf]
    %v820 = vld [vmem:[%s13 + $0x4c] sm:$0xf]
    %v821 = vld [vmem:[%s13 + $0x50] sm:$0xf]
    %v822 = vld [vmem:[%s13 + $0x54] sm:$0xf]
    %v823 = vld [vmem:[%s13 + $0x58] sm:$0xf]
    %v824 = vld [vmem:[%s13 + $0x5c] sm:$0xf]
    %v825 = vld [vmem:[%s13 + $0x60] sm:$0xf]
    %v826 = vld [vmem:[%s13 + $0x64] sm:$0xf]
    %v827 = vld [vmem:[%s13 + $0x68] sm:$0xf]
    %v828 = vld [vmem:[%s13 + $0x6c] sm:$0xf]
    %v829 = vld [vmem:[%s13 + $0x70] sm:$0xf]
    %v830 = vld [vmem:[%s13 + $0x74] sm:$0xf]
    %v831 = vld [vmem:[%s13 + $0x78] sm:$0xf]
    %v832 = vld [vmem:[%s13 + $0x7c] sm:$0xf]
    %v833 = vld [vmem:[%s5] sm:$0x1]
    %v835 = vperm.slane %v833, 0
    %v869 = vunpack.c.l.b16 %v801
    %v870 = vunpack.c.l.b16 %v802
    %v871 = vunpack.c.l.b16 %v803
    %v872 = vunpack.c.l.b16 %v804
    %v873 = vunpack.c.l.b16 %v805
    %v874 = vunpack.c.l.b16 %v806
    %v875 = vunpack.c.l.b16 %v807
    %v876 = vunpack.c.l.b16 %v808
    %v877 = vunpack.c.l.b16 %v809
    %v878 = vunpack.c.l.b16 %v810
    %v879 = vunpack.c.l.b16 %v811
    %v880 = vunpack.c.l.b16 %v812
    %v881 = vunpack.c.l.b16 %v813
    %v882 = vunpack.c.l.b16 %v814
    %v883 = vunpack.c.l.b16 %v815
    %v884 = vunpack.c.l.b16 %v816
    %v885 = vunpack.c.l.b16 %v817
    %v886 = vunpack.c.l.b16 %v818
    %v887 = vunpack.c.l.b16 %v819
    %v888 = vunpack.c.l.b16 %v820
    %v889 = vunpack.c.l.b16 %v821
    %v890 = vunpack.c.l.b16 %v822
    %v891 = vunpack.c.l.b16 %v823
    %v892 = vunpack.c.l.b16 %v824
    %v893 = vunpack.c.l.b16 %v825
    %v894 = vunpack.c.l.b16 %v826
    %v895 = vunpack.c.l.b16 %v827
    %v896 = vunpack.c.l.b16 %v828
    %v897 = vunpack.c.l.b16 %v829
    %v898 = vunpack.c.l.b16 %v830
    %v899 = vunpack.c.l.b16 %v831
    %v900 = vunpack.c.l.b16 %v832
    %v901 = vpack.c.b16 %v870, %v869
    %v902 = vpack.c.b16 %v872, %v871
    %v903 = vpack.c.b16 %v874, %v873
    %v904 = vpack.c.b16 %v876, %v875
    %v905 = vpack.c.b16 %v878, %v877
    %v906 = vpack.c.b16 %v880, %v879
    %v907 = vpack.c.b16 %v882, %v881
    %v908 = vpack.c.b16 %v884, %v883
    %v909 = vpack.c.b16 %v886, %v885
    %v910 = vpack.c.b16 %v888, %v887
    %v911 = vpack.c.b16 %v890, %v889
    %v912 = vpack.c.b16 %v892, %v891
    %v913 = vpack.c.b16 %v894, %v893
    %v914 = vpack.c.b16 %v896, %v895
    %v915 = vpack.c.b16 %v898, %v897
    %v916 = vpack.c.b16 %v900, %v899
    %933 = vmatpush.bf16.msra.mxu0 %v908
    %934 = vmatpush.bf16.msra.mxu0 %v907
    %935 = vmatpush.bf16.msra.mxu0 %v906
    %936 = vmatpush.bf16.msra.mxu0 %v905
    %937 = vmatpush.bf16.msra.mxu0 %v904
    %938 = vmatpush.bf16.msra.mxu0 %v903
    %939 = vmatpush.bf16.msra.mxu0 %v902
    %940 = vmatpush.bf16.msra.mxu0 %v901
    %941 = vmatmul.bf16.gmra.mxu0 %v799
    %v942 = vpop.f32.mrf.mxu0
    %v943 = vadd.f32 %v835, %v942
    %v944 = vpop.f32.mrf.mxu0
    %945 = vdwg.mxu0
    %946 = vmatpush.bf16.msra.mxu0 %v916
    %947 = vmatpush.bf16.msra.mxu0 %v915
    %948 = vmatpush.bf16.msra.mxu0 %v914
    %949 = vmatpush.bf16.msra.mxu0 %v913
    %950 = vmatpush.bf16.msra.mxu0 %v912
    %951 = vmatpush.bf16.msra.mxu0 %v911
    %952 = vmatpush.bf16.msra.mxu0 %v910
    %953 = vmatpush.bf16.msra.mxu0 %v909
    %954 = vmatmul.bf16.gmra.mxu0 %v800
    %v955 = vpop.f32.mrf.mxu0
    %v956 = vadd.f32 %v943, %v955
    %v957 = vpop.f32.mrf.mxu0
    %958 = vdwg.mxu0
    %959 = vst [vmem:[#allocation2] sm:$0x3] %v956
    // Predicated region
    $region58: #{_forward.1} parent=1 // pred_check
      _
    $region59: #{_forward.1} parent=1 // pred_check_branch
      %961 = sbr.rel (0) target = $region61
    $region60: #{_forward.1} parent=1 // pred_region
      %963 = vsyncadd [#allocation3], 0
      %s965 = sshll.u32 [#allocation2], 4
      %s966 = int_to_ptr.vmem [resolvable:$true] %s965
      %s967 = sshll.u32 %s14, 4
      %s968 = int_to_ptr.hbm [resolvable:$true] %s967
      %970 = dma.vmem_to_hbm [thread:$0]  %s966, 32, %s968, [#allocation3]
    $region61: #{_forward.1} parent=1 // pred_fallthru
      _
    // Predicated region
    $region62: #{_forward.1} parent=1 // pred_check
      _
    $region63: #{_forward.1} parent=1 // pred_check_branch
      %972 = sbr.rel (0) target = $region65
    $region64: #{_forward.1} parent=1 // pred_region
      %974 = dma.done [#allocation3], 32
    $region65: #{_forward.1} parent=1 // pred_fallthru
      _
    %975 = vsyncpa [#allocation3], 1

</llo_original>
